<compile_context>
chip_gen: v7x
topology: tpu7x:2x2x1
jax: 0.10.0
libtpu: 0.0.40
codegen_flags: <defaults>
</compile_context>

<pallas_src>
import jax
import jax.numpy as jnp
from jax.experimental import pallas as pl
from jax.experimental.pallas import tpu as pltpu

# ---------------- model hyper-params (small, consistent with forward) ----------
B = 2          # batch
T = 16         # seq_len
V = 8          # enc_in (num variates)
D = 32         # d_model
P = 8          # pred_len
EPS = 1e-5

R = B * V                     # folded row count (RevIN stats are per-row -> exact)
LANE = 128                    # lane-aligned gate stride inside the weight slab
SLAB_COLS = 4 * LANE          # [Wg|pad  Wv|pad  Wa|pad  Wproj|pad]
ROW_WMIX = 0                  # rows 0:D        -> mixing/projection weights
ROW_WEMB = D                  # rows D:D+T      -> embedding weights (cols 0:D)
ROW_PVEC = D + T              # rows 48:56      -> b_emb / ln_g / ln_b / bp
ROW_PROW = ROW_PVEC + 8       # rows 56:72      -> per-row gamma / beta / inv_gamma
SLAB_ROWS = ROW_PROW + R      # 72


def model_kernel(x_ref, p_ref, out_ref):
    xr = x_ref[...]                                   # (R, T) f32, already folded

    # ---- parameter views (single slab, static slices) ----
    w_mix = p_ref[ROW_WMIX:ROW_WMIX + D, :].astype(jnp.bfloat16)       # (D, 512)
    w_emb = p_ref[ROW_WEMB:ROW_WEMB + T, 0:D].astype(jnp.bfloat16)     # (T, D)
    pv = p_ref[ROW_PVEC:ROW_PVEC + 8, 0:D]                             # (8, D) f32
    b_emb = pv[0:1, :]                                                  # (1, D)
    ln_g = pv[1:2, :]
    ln_b = pv[2:3, :]
    bp = pv[3:4, 0:P]                                                   # (1, P)
    pr = p_ref[ROW_PROW:ROW_PROW + R, 0:8]                              # (R, 8) f32
    gamma = pr[:, 0:1]                                                  # (R, 1)
    beta = pr[:, 1:2]
    inv_gamma = pr[:, 2:3]                       # 1 / (sign(g)*max(|g|,eps)), host-side

    # ---- RevIN normalize (exact semantics of RevIN.forward) ----
    mean = jnp.mean(xr, axis=-1, keepdims=True)                        # (R, 1)
    var = jnp.mean((xr - mean) ** 2, axis=-1, keepdims=True)           # unbiased=False
    var_rsqrt = jax.lax.rsqrt(jnp.maximum(var, EPS))
    std = jnp.sqrt(var)          # unclamped, matches reverse_fn; EUP op hidden under MXU chain
    x_norm = (xr - mean) * var_rsqrt * gamma + beta                    # (R, T) f32

    # ---- enc_embedding ----
    # TODO(synk): PyramidalRNNEmbedding definition not provided; stand-in is a
    # per-variate linear embedding seq_len -> d_model.
    tok = jnp.dot(x_norm.astype(jnp.bfloat16), w_emb,
                  preferred_element_type=jnp.float32) + b_emb          # (R, D) f32

    # ---- fused mLSTM / AECCM gates: one wide matmul on the shared LHS ----
    # TODO(synk): mLSTMLayer / AECCM definitions not provided; stand-ins are a
    # GLU sigmoid(h Wg)*(h Wv) and a channel-attention map sigmoid(h Wa).
    gva = jnp.dot(tok.astype(jnp.bfloat16), w_mix[:, 0:3 * LANE],
                  preferred_element_type=jnp.float32)                  # (R, 384)
    g1 = jax.nn.sigmoid(gva[:, 0:D])                  # each gate starts at lane 0
    v1 = gva[:, LANE:LANE + D]
    a_out = jax.nn.sigmoid(gva[:, 2 * LANE:2 * LANE + D])
    m_out = g1 * v1 * a_out + tok                                      # (R, D)

    # ---- layernorm ----
    mu = jnp.mean(m_out, axis=-1, keepdims=True)
    sig = jnp.mean((m_out - mu) ** 2, axis=-1, keepdims=True)
    l_out = (m_out - mu) * jax.lax.rsqrt(sig + 1e-5) * ln_g + ln_b

    # ---- second mlstm pass (reuses the lane-aligned Wg|Wv slab) + residuals;
    #      dropout == identity in eval mode ----
    gv2 = jnp.dot(m_out.astype(jnp.bfloat16), w_mix[:, 0:2 * LANE],
                  preferred_element_type=jnp.float32)                  # (R, 256)
    m2 = jax.nn.sigmoid(gv2[:, 0:D]) * gv2[:, LANE:LANE + D]
    out = l_out + m2 + tok                                             # (R, D)

    # ---- projector: Linear(d_model -> pred_len) ----
    e = jnp.dot(out.astype(jnp.bfloat16), w_mix[:, 3 * LANE:3 * LANE + P],
                preferred_element_type=jnp.float32) + bp               # (R, P)

    # ---- RevIN reverse (exact semantics of reverse_fn) ----
    out_ref[...] = (e - beta) * inv_gamma * std + mean                 # (R, P)


def pack_params(params):
    """Host-side (one-time) packing of ALL parameters into one padded f32 slab.

    Rows 0:D      : [Wg | Wv | Wa | Wproj], each block lane-aligned to 128.
    Rows D:D+T    : W_emb in cols 0:D.
    Rows 48:56    : b_emb / ln_gamma / ln_beta / b_proj (one per row, cols 0:D).
    Rows 56:72    : per-row RevIN gamma / beta / precomputed inv_gamma (cols 0/1/2).
    """
    gamma, beta, w_emb, b_emb, wg, wv, wa, ln_g, ln_b, wp, bp = params
    slab = jnp.zeros((SLAB_ROWS, SLAB_COLS), jnp.float32)
    slab = slab.at[ROW_WMIX:ROW_WMIX + D, 0 * LANE:0 * LANE + D].set(wg)
    slab = slab.at[ROW_WMIX:ROW_WMIX + D, 1 * LANE:1 * LANE + D].set(wv)
    slab = slab.at[ROW_WMIX:ROW_WMIX + D, 2 * LANE:2 * LANE + D].set(wa)
    slab = slab.at[ROW_WMIX:ROW_WMIX + D, 3 * LANE:3 * LANE + P].set(wp)
    slab = slab.at[ROW_WEMB:ROW_WEMB + T, 0:D].set(w_emb)
    slab = slab.at[ROW_PVEC + 0, 0:D].set(b_emb[0])
    slab = slab.at[ROW_PVEC + 1, 0:D].set(ln_g[0])
    slab = slab.at[ROW_PVEC + 2, 0:D].set(ln_b[0])
    slab = slab.at[ROW_PVEC + 3, 0:P].set(bp[0])
    clamped_gamma = jnp.sign(gamma) * jnp.maximum(jnp.abs(gamma), EPS)
    inv_gamma = 1.0 / clamped_gamma          # same convention as reverse_fn
    slab = slab.at[ROW_PROW:ROW_PROW + R, 0:1].set(jnp.tile(gamma, (B, 1)))
    slab = slab.at[ROW_PROW:ROW_PROW + R, 1:2].set(jnp.tile(beta, (B, 1)))
    slab = slab.at[ROW_PROW:ROW_PROW + R, 2:3].set(jnp.tile(inv_gamma, (B, 1)))
    return slab


def forward(x_enc, p_slab):
    """x_enc: (B, T, V) float32, PyTorch-style (batch, seq_len, enc_in)."""
    # Layout plumbing outside the kernel: fold batch & variates into rows.
    x_rows = jnp.transpose(x_enc, (0, 2, 1)).reshape(R, T)          # (B*V, T)
    vmem = pl.BlockSpec(memory_space=pltpu.MemorySpace.VMEM)
    # Single invocation, no grid: total data is a few KB, so one step amortizes
    # all pipeline/DMA overhead.  Only 2 input DMAs: x + packed param slab.
    y_rows = pl.pallas_call(
        model_kernel,
        out_shape=jax.ShapeDtypeStruct((R, P), jnp.float32),
        in_specs=[vmem, vmem],
        out_specs=vmem,
    )(x_rows, p_slab)
    # Emit the PyTorch output layout (batch, pred_len, enc_in); projector
    # already produces exactly pred_len steps so no trailing slice is needed.
    return jnp.transpose(y_rows.reshape(B, V, P), (0, 2, 1))


def init_params():
    key = jax.random.PRNGKey(0)
    ks = jax.random.split(key, 6)
    gamma = jnp.ones((V, 1), jnp.float32)                  # RevIN gamma
    beta = jnp.zeros((V, 1), jnp.float32)                  # RevIN beta
    w_emb = 0.1 * jax.random.normal(ks[0], (T, D), jnp.float32)
    b_emb = jnp.zeros((1, D), jnp.float32)
    wg = 0.1 * jax.random.normal(ks[1], (D, D), jnp.float32)
    wv = 0.1 * jax.random.normal(ks[2], (D, D), jnp.float32)
    wa = 0.1 * jax.random.normal(ks[3], (D, D), jnp.float32)
    ln_g = jnp.ones((1, D), jnp.float32)
    ln_b = jnp.zeros((1, D), jnp.float32)
    wp = 0.1 * jax.random.normal(ks[4], (D, P), jnp.float32)
    bp = 0.01 * jax.random.normal(ks[5], (1, P), jnp.float32)
    return (gamma, beta, w_emb, b_emb, wg, wv, wa, ln_g, ln_b, wp, bp)


if __name__ == "__main__":
    key = jax.random.PRNGKey(0)
    x_enc = jax.random.normal(key, (B, T, V), jnp.float32)   # (batch, seq_len, enc_in)
    p_slab = pack_params(init_params())
    # If this model is called repeatedly, batch many problems into one
    # pallas_call rather than tuning this single call further.
    y = jax.jit(forward)(x_enc, p_slab)
    y = jax.block_until_ready(y)
    assert y.shape == (B, P, V), y.shape
    assert bool(jnp.all(jnp.isfinite(y)))
    print("KERNEL_OK")
</pallas_src>

<mosaic_0001>
module attributes {stable_mosaic.version = 11 : i64} {
  func.func @model_kernel(%arg0: memref<16x16xf32, #tpu.memory_space<vmem>>, %arg1: memref<72x512xf32, #tpu.memory_space<vmem>>, %arg2: memref<16x8xf32, #tpu.memory_space<vmem>>) attributes {dimension_semantics = [], scalar_prefetch = 0 : i64, scratch_operands = 0 : i64, tpu.core_type = #tpu.core_type<tc>} {
    %c0 = arith.constant 0 : index
    %c0_0 = arith.constant 0 : index
    %0 = vector.load %arg0[%c0, %c0_0] : memref<16x16xf32, #tpu.memory_space<vmem>>, vector<16x16xf32>
    %c0_1 = arith.constant 0 : index
    %c0_2 = arith.constant 0 : index
    %1 = vector.load %arg1[%c0_1, %c0_2] : memref<72x512xf32, #tpu.memory_space<vmem>>, vector<32x512xf32>
    %2 = arith.truncf %1 : vector<32x512xf32> to vector<32x512xbf16>
    %c32 = arith.constant 32 : index
    %c0_3 = arith.constant 0 : index
    %3 = vector.load %arg1[%c32, %c0_3] : memref<72x512xf32, #tpu.memory_space<vmem>>, vector<16x32xf32>
    %4 = arith.truncf %3 : vector<16x32xf32> to vector<16x32xbf16>
    %c48 = arith.constant 48 : index
    %c0_4 = arith.constant 0 : index
    %5 = vector.load %arg1[%c48, %c0_4] : memref<72x512xf32, #tpu.memory_space<vmem>>, vector<8x32xf32>
    %6 = vector.extract_strided_slice %5 {offsets = [0, 0], sizes = [1, 32], strides = [1, 1]} : vector<8x32xf32> to vector<1x32xf32>
    %7 = vector.extract_strided_slice %5 {offsets = [1, 0], sizes = [1, 32], strides = [1, 1]} : vector<8x32xf32> to vector<1x32xf32>
    %8 = vector.extract_strided_slice %5 {offsets = [2, 0], sizes = [1, 32], strides = [1, 1]} : vector<8x32xf32> to vector<1x32xf32>
    %9 = vector.extract_strided_slice %5 {offsets = [3, 0], sizes = [1, 8], strides = [1, 1]} : vector<8x32xf32> to vector<1x8xf32>
    %c56 = arith.constant 56 : index
    %c0_5 = arith.constant 0 : index
    %10 = vector.load %arg1[%c56, %c0_5] : memref<72x512xf32, #tpu.memory_space<vmem>>, vector<16x8xf32>
    %11 = vector.extract_strided_slice %10 {offsets = [0, 0], sizes = [16, 1], strides = [1, 1]} : vector<16x8xf32> to vector<16x1xf32>
    %12 = vector.extract_strided_slice %10 {offsets = [0, 1], sizes = [16, 1], strides = [1, 1]} : vector<16x8xf32> to vector<16x1xf32>
    %13 = vector.extract_strided_slice %10 {offsets = [0, 2], sizes = [16, 1], strides = [1, 1]} : vector<16x8xf32> to vector<16x1xf32>
    %cst = arith.constant dense<0.000000e+00> : vector<16xf32>
    %14 = vector.multi_reduction <add>, %0, %cst [1] : vector<16x16xf32> to vector<16xf32>
    %15 = vector.shape_cast %14 : vector<16xf32> to vector<16x1xf32>
    %cst_6 = arith.constant 1.600000e+01 : f32
    %16 = vector.broadcast %cst_6 : f32 to vector<16x1xf32>
    %17 = arith.divf %15, %16 : vector<16x1xf32>
    %18 = vector.broadcast %17 : vector<16x1xf32> to vector<16x16xf32>
    %19 = arith.subf %0, %18 : vector<16x16xf32>
    %20 = arith.mulf %19, %19 : vector<16x16xf32>
    %cst_7 = arith.constant dense<0.000000e+00> : vector<16xf32>
    %21 = vector.multi_reduction <add>, %20, %cst_7 [1] : vector<16x16xf32> to vector<16xf32>
    %22 = vector.shape_cast %21 : vector<16xf32> to vector<16x1xf32>
    %cst_8 = arith.constant 1.600000e+01 : f32
    %23 = vector.broadcast %cst_8 : f32 to vector<16x1xf32>
    %24 = arith.divf %22, %23 : vector<16x1xf32>
    %cst_9 = arith.constant 9.99999974E-6 : f32
    %25 = vector.broadcast %cst_9 : f32 to vector<16x1xf32>
    %26 = arith.maximumf %24, %25 : vector<16x1xf32>
    %27 = math.rsqrt %26 : vector<16x1xf32>
    %28 = math.sqrt %24 : vector<16x1xf32>
    %29 = vector.broadcast %17 : vector<16x1xf32> to vector<16x16xf32>
    %30 = arith.subf %0, %29 : vector<16x16xf32>
    %31 = vector.broadcast %27 : vector<16x1xf32> to vector<16x16xf32>
    %32 = arith.mulf %30, %31 : vector<16x16xf32>
    %33 = vector.broadcast %11 : vector<16x1xf32> to vector<16x16xf32>
    %34 = arith.mulf %32, %33 : vector<16x16xf32>
    %35 = vector.broadcast %12 : vector<16x1xf32> to vector<16x16xf32>
    %36 = arith.addf %34, %35 : vector<16x16xf32>
    %37 = arith.truncf %36 : vector<16x16xf32> to vector<16x16xbf16>
    %cst_10 = arith.constant dense<0.000000e+00> : vector<16x32xf32>
    %38 = tpu.matmul %37, %4, %cst_10 {dimension_numbers = #tpu.dot_dimension_numbers<[1], [0], [0], [1], [0, 0, 1, 1], [], []>} : vector<16x16xbf16>, vector<16x32xbf16>, vector<16x32xf32> -> vector<16x32xf32>
    %39 = vector.broadcast %6 : vector<1x32xf32> to vector<16x32xf32>
    %40 = arith.addf %38, %39 : vector<16x32xf32>
    %41 = arith.truncf %40 : vector<16x32xf32> to vector<16x32xbf16>
    %42 = vector.extract_strided_slice %2 {offsets = [0, 0], sizes = [32, 384], strides = [1, 1]} : vector<32x512xbf16> to vector<32x384xbf16>
    %cst_11 = arith.constant dense<0.000000e+00> : vector<16x384xf32>
    %43 = tpu.matmul %41, %42, %cst_11 {dimension_numbers = #tpu.dot_dimension_numbers<[1], [0], [0], [1], [0, 0, 1, 1], [], []>} : vector<16x32xbf16>, vector<32x384xbf16>, vector<16x384xf32> -> vector<16x384xf32>
    %44 = vector.extract_strided_slice %43 {offsets = [0, 0], sizes = [16, 32], strides = [1, 1]} : vector<16x384xf32> to vector<16x32xf32>
    %45 = arith.negf %44 : vector<16x32xf32>
    %46 = math.exp %45 : vector<16x32xf32>
    %cst_12 = arith.constant 1.000000e+00 : f32
    %47 = vector.broadcast %cst_12 : f32 to vector<16x32xf32>
    %48 = arith.addf %47, %46 : vector<16x32xf32>
    %49 = arith.divf %47, %48 : vector<16x32xf32>
    %50 = vector.extract_strided_slice %43 {offsets = [0, 128], sizes = [16, 32], strides = [1, 1]} : vector<16x384xf32> to vector<16x32xf32>
    %51 = vector.extract_strided_slice %43 {offsets = [0, 256], sizes = [16, 32], strides = [1, 1]} : vector<16x384xf32> to vector<16x32xf32>
    %52 = arith.negf %51 : vector<16x32xf32>
    %53 = math.exp %52 : vector<16x32xf32>
    %cst_13 = arith.constant 1.000000e+00 : f32
    %54 = vector.broadcast %cst_13 : f32 to vector<16x32xf32>
    %55 = arith.addf %54, %53 : vector<16x32xf32>
    %56 = arith.divf %54, %55 : vector<16x32xf32>
    %57 = arith.mulf %49, %50 : vector<16x32xf32>
    %58 = arith.mulf %57, %56 : vector<16x32xf32>
    %59 = arith.addf %58, %40 : vector<16x32xf32>
    %cst_14 = arith.constant dense<0.000000e+00> : vector<16xf32>
    %60 = vector.multi_reduction <add>, %59, %cst_14 [1] : vector<16x32xf32> to vector<16xf32>
    %61 = vector.shape_cast %60 : vector<16xf32> to vector<16x1xf32>
    %cst_15 = arith.constant 3.200000e+01 : f32
    %62 = vector.broadcast %cst_15 : f32 to vector<16x1xf32>
    %63 = arith.divf %61, %62 : vector<16x1xf32>
    %64 = vector.broadcast %63 : vector<16x1xf32> to vector<16x32xf32>
    %65 = arith.subf %59, %64 : vector<16x32xf32>
    %66 = arith.mulf %65, %65 : vector<16x32xf32>
    %cst_16 = arith.constant dense<0.000000e+00> : vector<16xf32>
    %67 = vector.multi_reduction <add>, %66, %cst_16 [1] : vector<16x32xf32> to vector<16xf32>
    %68 = vector.shape_cast %67 : vector<16xf32> to vector<16x1xf32>
    %cst_17 = arith.constant 3.200000e+01 : f32
    %69 = vector.broadcast %cst_17 : f32 to vector<16x1xf32>
    %70 = arith.divf %68, %69 : vector<16x1xf32>
    %71 = vector.broadcast %63 : vector<16x1xf32> to vector<16x32xf32>
    %72 = arith.subf %59, %71 : vector<16x32xf32>
    %cst_18 = arith.constant 9.99999974E-6 : f32
    %73 = vector.broadcast %cst_18 : f32 to vector<16x1xf32>
    %74 = arith.addf %70, %73 : vector<16x1xf32>
    %75 = math.rsqrt %74 : vector<16x1xf32>
    %76 = vector.broadcast %75 : vector<16x1xf32> to vector<16x32xf32>
    %77 = arith.mulf %72, %76 : vector<16x32xf32>
    %78 = vector.broadcast %7 : vector<1x32xf32> to vector<16x32xf32>
    %79 = arith.mulf %77, %78 : vector<16x32xf32>
    %80 = vector.broadcast %8 : vector<1x32xf32> to vector<16x32xf32>
    %81 = arith.addf %79, %80 : vector<16x32xf32>
    %82 = arith.truncf %59 : vector<16x32xf32> to vector<16x32xbf16>
    %83 = vector.extract_strided_slice %2 {offsets = [0, 0], sizes = [32, 256], strides = [1, 1]} : vector<32x512xbf16> to vector<32x256xbf16>
    %cst_19 = arith.constant dense<0.000000e+00> : vector<16x256xf32>
    %84 = tpu.matmul %82, %83, %cst_19 {dimension_numbers = #tpu.dot_dimension_numbers<[1], [0], [0], [1], [0, 0, 1, 1], [], []>} : vector<16x32xbf16>, vector<32x256xbf16>, vector<16x256xf32> -> vector<16x256xf32>
    %85 = vector.extract_strided_slice %84 {offsets = [0, 0], sizes = [16, 32], strides = [1, 1]} : vector<16x256xf32> to vector<16x32xf32>
    %86 = arith.negf %85 : vector<16x32xf32>
    %87 = math.exp %86 : vector<16x32xf32>
    %cst_20 = arith.constant 1.000000e+00 : f32
    %88 = vector.broadcast %cst_20 : f32 to vector<16x32xf32>
    %89 = arith.addf %88, %87 : vector<16x32xf32>
    %90 = arith.divf %88, %89 : vector<16x32xf32>
    %91 = vector.extract_strided_slice %84 {offsets = [0, 128], sizes = [16, 32], strides = [1, 1]} : vector<16x256xf32> to vector<16x32xf32>
    %92 = arith.mulf %90, %91 : vector<16x32xf32>
    %93 = arith.addf %81, %92 : vector<16x32xf32>
    %94 = arith.addf %93, %40 : vector<16x32xf32>
    %95 = arith.truncf %94 : vector<16x32xf32> to vector<16x32xbf16>
    %96 = vector.extract_strided_slice %2 {offsets = [0, 384], sizes = [32, 8], strides = [1, 1]} : vector<32x512xbf16> to vector<32x8xbf16>
    %cst_21 = arith.constant dense<0.000000e+00> : vector<16x8xf32>
    %97 = tpu.matmul %95, %96, %cst_21 {dimension_numbers = #tpu.dot_dimension_numbers<[1], [0], [0], [1], [0, 0, 1, 1], [], []>} : vector<16x32xbf16>, vector<32x8xbf16>, vector<16x8xf32> -> vector<16x8xf32>
    %98 = vector.broadcast %9 : vector<1x8xf32> to vector<16x8xf32>
    %99 = arith.addf %97, %98 : vector<16x8xf32>
    %100 = vector.broadcast %12 : vector<16x1xf32> to vector<16x8xf32>
    %101 = arith.subf %99, %100 : vector<16x8xf32>
    %102 = vector.broadcast %13 : vector<16x1xf32> to vector<16x8xf32>
    %103 = arith.mulf %101, %102 : vector<16x8xf32>
    %104 = vector.broadcast %28 : vector<16x1xf32> to vector<16x8xf32>
    %105 = arith.mulf %103, %104 : vector<16x8xf32>
    %106 = vector.broadcast %17 : vector<16x1xf32> to vector<16x8xf32>
    %107 = arith.addf %105, %106 : vector<16x8xf32>
    %c0_22 = arith.constant 0 : index
    %c0_23 = arith.constant 0 : index
    %108 = vector.load %arg2[%c0_22, %c0_23] : memref<16x8xf32, #tpu.memory_space<vmem>>, vector<16x8xf32>
    tpu.vector_store %arg2[%c0_22, %c0_23], %107 {strides = array<i32>} : memref<16x8xf32, #tpu.memory_space<vmem>>, vector<16x8xf32>,
    return
  }
}

</mosaic_0001>

<llo_original>
// kernel: forward.1
$region0: #{forward.1}
  #allocation0 [shape = 'u32[]', space=smem, size = 0x4, offset = 0x4, fixed_abs, tag = 'smem constant byte address 0x4 - core index']
  #allocation1 [shape = 'u32[144,128]{1,0:T(1,128)}', space=vmem, size = 0x12000, scoped, tag = 'internal scratch']
  %s0 = inlined_call_operand.hbm [shape: f32[16,16], index: 0, kind: input, shape index: {}]
  %s1 = inlined_call_operand.hbm [shape: f32[72,512], index: 1, kind: input, shape index: {}]
  %s2 = inlined_call_operand.vmem [shape: f32[16,8], index: 2, kind: output, shape index: {}]
  %s3 = sld [smem:[#allocation0]]
  $region26: #{forward.1} parent=0
    _
  %s5 = ssub.s32 1, %s3
  %s6 = scalar_select 0, %s5, %s3
  $region1: #{forward.1} parent=0
    #allocation2 [shape = 'u8[8192]{0}', space=vmem, size = 0x2000, scoped, tag = 'input window, operand 0, single buffered']
    #allocation3 [shape = 's32[1]{0}', space=sflag, size = 0x4, scoped, tag = 'scoped memory for forward.1']
    #allocation4 [shape = 'u8[147456]{0}', space=vmem, size = 0x24000, scoped, tag = 'input window, operand 1, single buffered']
    #allocation5 [shape = 's32[1]{0}', space=sflag, size = 0x4, scoped, tag = 'scoped memory for forward.1']
    %7 = vsyncpa [#allocation3], 0
    %8 = vsyncpa [#allocation5], 0
    // Predicated region
    $region2: #{forward.1} parent=1 // pred_check
      _
    $region3: #{forward.1} parent=1 // pred_check_branch
      %10 = sbr.rel (0) target = $region5
    $region4: #{forward.1} parent=1 // pred_region
      %s12 = ssub.s32 256, 256
      %13 = vsyncadd [#allocation3], %s12
      %s14 = sshll.u32 [#allocation2], 4
      %s15 = int_to_ptr.vmem [resolvable:$true] %s14
      %20 = dma.hbm_to_vmem [thread:$0]  %s0, 256, %s15, [#allocation3], 128, 128, 8
    $region5: #{forward.1} parent=1 // pred_fallthru
      _
    // Predicated region
    $region6: #{forward.1} parent=1 // pred_check
      _
    $region7: #{forward.1} parent=1 // pred_check_branch
      %22 = sbr.rel (0) target = $region9
    $region8: #{forward.1} parent=1 // pred_region
      %s24 = ssub.s32 4608, 4608
      %25 = vsyncadd [#allocation5], %s24
      %s26 = sshll.u32 [#allocation4], 4
      %s27 = int_to_ptr.vmem [resolvable:$true] %s26
      %32 = dma.hbm_to_vmem [thread:$0]  %s1, 4608, %s27, [#allocation5], 512, 512, 32
    $region9: #{forward.1} parent=1 // pred_fallthru
      _
    // Predicated region
    $region10: #{forward.1} parent=1 // pred_check
      _
    $region11: #{forward.1} parent=1 // pred_check_branch
      %34 = sbr.rel (0) target = $region13
    $region12: #{forward.1} parent=1 // pred_region
      %35 = dma.done [#allocation3], 256
    $region13: #{forward.1} parent=1 // pred_fallthru
      _
    // Predicated region
    $region14: #{forward.1} parent=1 // pred_check
      _
    $region15: #{forward.1} parent=1 // pred_check_branch
      %37 = sbr.rel (0) target = $region17
    $region16: #{forward.1} parent=1 // pred_region
      %38 = dma.done [#allocation5], 4608
    $region17: #{forward.1} parent=1 // pred_fallthru
      _
    %v40 = vld [vmem:[#allocation2] sm:$0xff]
    %v41 = vld [vmem:[#allocation2 + $0x8] sm:$0xff]
    %v42 = vld [vmem:[#allocation4] sm:$0xff]
    %v43 = vld [vmem:[#allocation4 + $0x8] sm:$0xff]
    %v44 = vld [vmem:[#allocation4 + $0x10] sm:$0xff]
    %v45 = vld [vmem:[#allocation4 + $0x18] sm:$0xff]
    %v46 = vld [vmem:[#allocation4 + $0x20] sm:$0xff]
    %v47 = vld [vmem:[#allocation4 + $0x28] sm:$0xff]
    %v48 = vld [vmem:[#allocation4 + $0x30] sm:$0xff]
    %v49 = vld [vmem:[#allocation4 + $0x38] sm:$0xff]
    %v50 = vld [vmem:[#allocation4 + $0x40] sm:$0xff]
    %v51 = vld [vmem:[#allocation4 + $0x48] sm:$0xff]
    %v52 = vld [vmem:[#allocation4 + $0x50] sm:$0xff]
    %v53 = vld [vmem:[#allocation4 + $0x58] sm:$0xff]
    %v54 = vld [vmem:[#allocation4 + $0x60] sm:$0xff]
    %v55 = vld [vmem:[#allocation4 + $0x68] sm:$0xff]
    %v56 = vld [vmem:[#allocation4 + $0x70] sm:$0xff]
    %v57 = vld [vmem:[#allocation4 + $0x78] sm:$0xff]
    %v58 = vpack.c.bf16 %v46, %v42
    %v59 = vpack.c.bf16 %v47, %v43
    %v60 = vpack.c.bf16 %v48, %v44
    %v61 = vpack.c.bf16 %v49, %v45
    %v62 = vpack.c.bf16 %v54, %v50
    %v63 = vpack.c.bf16 %v55, %v51
    %v64 = vpack.c.bf16 %v56, %v52
    %v65 = vpack.c.bf16 %v57, %v53
    %v66 = vld [vmem:[#allocation4 + $0x80] sm:$0xff]
    %v67 = vld [vmem:[#allocation4 + $0xa0] sm:$0xff]
    %v68 = vpack.c.bf16 %v67, %v66
    %v69 = vld [vmem:[#allocation4 + $0xc0] sm:$0xff]
    %v70 = vld [vmem:[#allocation4 + $0xe0] sm:$0xff]
    %v71 = vld [vmem:[#allocation4 + $0x100] sm:$0xff]
    %vm72 = vcmask 130048
    %v73 = vsel %vm72, %v40, 0.0
    %74 = vadd.xlane.f32.xlu0 %v73
    %v75 = vpop.xlane.xlu0 %74
    %v76 = vsel %vm72, %v41, 0.0
    %77 = vadd.xlane.f32.xlu0 %v76
    %v78 = vpop.xlane.xlu0 %77
    %v79 = vrcp.pop 16.0
    %v80 = vmul.f32 %v75, %v79
    %v81 = vmul.f32 %v78, %v79
    %v82 = vsub.f32 %v40, %v80
    %v83 = vsub.f32 %v41, %v81
    %v84 = vmul.f32 %v82, %v82
    %v85 = vmul.f32 %v83, %v83
    %v86 = vsel %vm72, %v84, 0.0
    %87 = vadd.xlane.f32.xlu0 %v86
    %v88 = vpop.xlane.xlu0 %87
    %v89 = vsel %vm72, %v85, 0.0
    %90 = vadd.xlane.f32.xlu0 %v89
    %v91 = vpop.xlane.xlu0 %90
    %v92 = vmul.f32 %v88, %v79
    %v93 = vmul.f32 %v91, %v79
    %v94 = vmax.f32 %v92, 1e-05
    %v95 = vmax.f32 %v93, 1e-05
    %v96 = vrsqrt.pop %v94
    %v97 = vrsqrt.pop %v95
    %v98 = vrsqrt.pop %v92
    %v99 = vmul.f32 %v92, %v98
    %vm100 = vcmp.eq.f32.partialorder %v92, inf
    %v101 = vsel %vm100, %v92, %v99
    %vm102 = vcmp.eq.f32.partialorder %v92, 0.0
    %v103 = vand.u32 %v92, 2147483648
    %v104 = vsel %vm102, %v103, %v101
    %v105 = vrsqrt.pop %v93
    %v106 = vmul.f32 %v93, %v105
    %vm107 = vcmp.eq.f32.partialorder %v93, inf
    %v108 = vsel %vm107, %v93, %v106
    %vm109 = vcmp.eq.f32.partialorder %v93, 0.0
    %v110 = vand.u32 %v93, 2147483648
    %v111 = vsel %vm109, %v110, %v108
    %v112 = vmul.f32 %v82, %v96
    %v113 = vmul.f32 %v83, %v97
    %115 = vset.pattern.permute.xlu0 0
    %116 = vperm.xlu0 %115, %v70
    %v117 = vpop.permute.xlu0 %116
    %120 = vset.pattern.permute.xlu0 0
    %121 = vperm.xlu0 %120, %v71
    %v122 = vpop.permute.xlu0 %121
    %v124 = vmul.f32 %v112, %v117
    %v125 = vmul.f32 %v113, %v122
    %126 = vset.pattern.permute.xlu0 1
    %127 = vperm.xlu0 %126, %v70
    %v128 = vpop.permute.xlu0 %127
    %130 = vset.pattern.permute.xlu0 1
    %131 = vperm.xlu0 %130, %v71
    %v132 = vpop.permute.xlu0 %131
    %v134 = vadd.f32 %v124, %v128
    %v135 = vadd.f32 %v125, %v132
    %v136 = vpack.c.bf16 %v135, %v134
    %v137 = vlaneseq
    %v138 = vshrl.u32 %v137, 7
    %v139 = vsub.s32 0, %v138
    %v140 = vrot.slane %v69, %v139
    %v142 = vsel %vm72, %v136, 0
    %144 = vmatprep.subr.bf16.mxu0 0
    %145 = vmatpush1.bf16.msra.mxu0 %v68
    %146 = vmatprep.subr.bf16.mxu0 0
    %147 = vmatpush1.bf16.msra.mxu0 0
    %148 = vmatprep.subr.bf16.mxu0 0
    %149 = vmatpush1.bf16.msra.mxu0 0
    %150 = vmatprep.subr.bf16.mxu0 0
    %151 = vmatpush1.bf16.msra.mxu0 0
    %152 = vmatprep.subr.bf16.mxu0 0
    %153 = vmatpush1.bf16.msra.mxu0 0
    %154 = vmatprep.subr.bf16.mxu0 0
    %155 = vmatpush1.bf16.msra.mxu0 0
    %156 = vmatprep.subr.bf16.mxu0 0
    %157 = vmatpush1.bf16.msra.mxu0 0
    %158 = vmatprep.subr.bf16.mxu0 0
    %159 = vmatpush1.bf16.msra.mxu0 0
    %160 = vmatprep.subr.bf16.mxu0 0
    %161 = vmatpush1.bf16.msra.mxu0 0
    %162 = vmatprep.subr.bf16.mxu0 0
    %163 = vmatpush1.bf16.msra.mxu0 0
    %164 = vmatprep.subr.bf16.mxu0 0
    %165 = vmatpush1.bf16.msra.mxu0 0
    %166 = vmatprep.subr.bf16.mxu0 0
    %167 = vmatpush1.bf16.msra.mxu0 0
    %168 = vmatprep.subr.bf16.mxu0 0
    %169 = vmatpush1.bf16.msra.mxu0 0
    %170 = vmatprep.subr.bf16.mxu0 0
    %171 = vmatpush1.bf16.msra.mxu0 0
    %172 = vmatprep.subr.bf16.mxu0 0
    %173 = vmatpush1.bf16.msra.mxu0 0
    %174 = vmatprep.subr.bf16.mxu0 0
    %175 = vmatpush1.bf16.msra.mxu0 0
    %176 = vmatprep.mubr.bf16.mxu0 0
    %177 = vmatmul.mubr.bf16.gmra.mrb[0].mxu0 %v142
    %v178 = vpop.f32.mrb[0].mxu0
    %v179 = vadd.f32 %v140, %v178
    %v180 = vpop.f32.mrb[0].mxu0
    %v181 = vpop.f32.mrb[0].mxu0
    %v182 = vadd.f32 %v140, %v181
    %v183 = vpop.f32.mrb[0].mxu0
    %184 = vdwg.mxu0
    %v185 = vpack.c.bf16 %v182, %v179
    %vm186 = vcmask 261120
    %v188 = vsel %vm186, %v185, 0
    %190 = vmatprep.subr.bf16.mxu0 %v59
    %191 = vmatpush1.bf16.msra.mxu0 %v58
    %192 = vmatprep.subr.bf16.mxu0 %v63
    %193 = vmatpush1.bf16.msra.mxu0 %v62
    %194 = vmatprep.subr.bf16.mxu0 0
    %195 = vmatpush1.bf16.msra.mxu0 0
    %196 = vmatprep.subr.bf16.mxu0 0
    %197 = vmatpush1.bf16.msra.mxu0 0
    %198 = vmatprep.subr.bf16.mxu0 0
    %199 = vmatpush1.bf16.msra.mxu0 0
    %200 = vmatprep.subr.bf16.mxu0 0
    %201 = vmatpush1.bf16.msra.mxu0 0
    %202 = vmatprep.subr.bf16.mxu0 0
    %203 = vmatpush1.bf16.msra.mxu0 0
    %204 = vmatprep.subr.bf16.mxu0 0
    %205 = vmatpush1.bf16.msra.mxu0 0
    %206 = vmatprep.subr.bf16.mxu0 0
    %207 = vmatpush1.bf16.msra.mxu0 0
    %208 = vmatprep.subr.bf16.mxu0 0
    %209 = vmatpush1.bf16.msra.mxu0 0
    %210 = vmatprep.subr.bf16.mxu0 0
    %211 = vmatpush1.bf16.msra.mxu0 0
    %212 = vmatprep.subr.bf16.mxu0 0
    %213 = vmatpush1.bf16.msra.mxu0 0
    %214 = vmatprep.subr.bf16.mxu0 0
    %215 = vmatpush1.bf16.msra.mxu0 0
    %216 = vmatprep.subr.bf16.mxu0 0
    %217 = vmatpush1.bf16.msra.mxu0 0
    %218 = vmatprep.subr.bf16.mxu0 0
    %219 = vmatpush1.bf16.msra.mxu0 0
    %220 = vmatprep.subr.bf16.mxu0 0
    %221 = vmatpush1.bf16.msra.mxu0 0
    %222 = vmatprep.mubr.bf16.mxu0 0
    %223 = vmatmul.mubr.bf16.gmra.mrb[0].mxu0 %v188
    %v224 = vpop.f32.mrb[0].mxu0
    %v225 = vadd.f32 0.0, %v224
    %v226 = vpop.f32.mrb[0].mxu0
    %v227 = vadd.f32 0.0, %v226
    %v228 = vpop.f32.mrb[0].mxu0
    %v229 = vadd.f32 0.0, %v228
    %v230 = vpop.f32.mrb[0].mxu0
    %v231 = vadd.f32 0.0, %v230
    %232 = vdwg.mxu0
    %233 = vmatprep.subr.bf16.mxu0 0
    %234 = vmatpush1.bf16.msra.mxu0 %v60
    %235 = vmatprep.subr.bf16.mxu0 0
    %236 = vmatpush1.bf16.msra.mxu0 %v64
    %237 = vmatprep.subr.bf16.mxu0 0
    %238 = vmatpush1.bf16.msra.mxu0 0
    %239 = vmatprep.subr.bf16.mxu0 0
    %240 = vmatpush1.bf16.msra.mxu0 0
    %241 = vmatprep.subr.bf16.mxu0 0
    %242 = vmatpush1.bf16.msra.mxu0 0
    %243 = vmatprep.subr.bf16.mxu0 0
    %244 = vmatpush1.bf16.msra.mxu0 0
    %245 = vmatprep.subr.bf16.mxu0 0
    %246 = vmatpush1.bf16.msra.mxu0 0
    %247 = vmatprep.subr.bf16.mxu0 0
    %248 = vmatpush1.bf16.msra.mxu0 0
    %249 = vmatprep.subr.bf16.mxu0 0
    %250 = vmatpush1.bf16.msra.mxu0 0
    %251 = vmatprep.subr.bf16.mxu0 0
    %252 = vmatpush1.bf16.msra.mxu0 0
    %253 = vmatprep.subr.bf16.mxu0 0
    %254 = vmatpush1.bf16.msra.mxu0 0
    %255 = vmatprep.subr.bf16.mxu0 0
    %256 = vmatpush1.bf16.msra.mxu0 0
    %257 = vmatprep.subr.bf16.mxu0 0
    %258 = vmatpush1.bf16.msra.mxu0 0
    %259 = vmatprep.subr.bf16.mxu0 0
    %260 = vmatpush1.bf16.msra.mxu0 0
    %261 = vmatprep.subr.bf16.mxu0 0
    %262 = vmatpush1.bf16.msra.mxu0 0
    %263 = vmatprep.subr.bf16.mxu0 0
    %264 = vmatpush1.bf16.msra.mxu0 0
    %265 = vmatprep.mubr.bf16.mxu0 0
    %266 = vmatmul.mubr.bf16.gmra.mrb[0].mxu0 %v188
    %v267 = vpop.f32.mrb[0].mxu0
    %v268 = vadd.f32 0.0, %v267
    %v269 = vpop.f32.mrb[0].mxu0
    %v270 = vpop.f32.mrb[0].mxu0
    %v271 = vadd.f32 0.0, %v270
    %v272 = vpop.f32.mrb[0].mxu0
    %273 = vdwg.mxu0
    %v274 = vxor.u32 %v225, 2147483648
    %v275 = vxor.u32 %v229, 2147483648
    %v276 = vmul.f32 %v274, 1.442695
    %v277 = vpow.pop %v276
    %v278 = vmul.f32 %v275, 1.442695
    %v279 = vpow.pop %v278
    %v280 = vadd.f32 %v277, 1.0
    %v281 = vadd.f32 %v279, 1.0
    %v282 = vrcp.pop %v280
    %v283 = vmul.f32 1.0, %v282
    %v284 = vrcp.pop %v281
    %v285 = vmul.f32 1.0, %v284
    %v286 = vxor.u32 %v268, 2147483648
    %v287 = vxor.u32 %v271, 2147483648
    %v288 = vmul.f32 %v286, 1.442695
    %v289 = vpow.pop %v288
    %v290 = vmul.f32 %v287, 1.442695
    %v291 = vpow.pop %v290
    %v292 = vadd.f32 %v289, 1.0
    %v293 = vadd.f32 %v291, 1.0
    %v294 = vrcp.pop %v292
    %v295 = vmul.f32 1.0, %v294
    %v296 = vrcp.pop %v293
    %v297 = vmul.f32 1.0, %v296
    %v298 = vmul.f32 %v283, %v227
    %v299 = vmul.f32 %v285, %v231
    %v300 = vmul.f32 %v298, %v295
    %v301 = vmul.f32 %v299, %v297
    %v302 = vadd.f32 %v300, %v179
    %v303 = vadd.f32 %v301, %v182
    %v304 = vsel %vm186, %v302, 0.0
    %305 = vadd.xlane.f32.xlu0 %v304
    %v306 = vpop.xlane.xlu0 %305
    %v307 = vsel %vm186, %v303, 0.0
    %308 = vadd.xlane.f32.xlu0 %v307
    %v309 = vpop.xlane.xlu0 %308
    %v310 = vrcp.pop 32.0
    %v311 = vmul.f32 %v306, %v310
    %v312 = vmul.f32 %v309, %v310
    %v313 = vsub.f32 %v302, %v311
    %v314 = vsub.f32 %v303, %v312
    %v315 = vmul.f32 %v313, %v313
    %v316 = vmul.f32 %v314, %v314
    %v317 = vsel %vm186, %v315, 0.0
    %318 = vadd.xlane.f32.xlu0 %v317
    %v319 = vpop.xlane.xlu0 %318
    %v320 = vsel %vm186, %v316, 0.0
    %321 = vadd.xlane.f32.xlu0 %v320
    %v322 = vpop.xlane.xlu0 %321
    %v323 = vmul.f32 %v319, %v310
    %v324 = vmul.f32 %v322, %v310
    %v325 = vadd.f32 %v323, 1e-05
    %v326 = vadd.f32 %v324, 1e-05
    %v327 = vrsqrt.pop %v325
    %v328 = vrsqrt.pop %v326
    %v329 = vmul.f32 %v313, %v327
    %v330 = vmul.f32 %v314, %v328
    %v331 = vlaneseq
    %v332 = vshrl.u32 %v331, 7
    %v333 = vsub.s32 1, %v332
    %v334 = vrot.slane %v69, %v333
    %v335 = vmul.f32 %v329, %v334
    %v336 = vmul.f32 %v330, %v334
    %v337 = vlaneseq
    %v338 = vshrl.u32 %v337, 7
    %v339 = vsub.s32 2, %v338
    %v340 = vrot.slane %v69, %v339
    %v341 = vadd.f32 %v335, %v340
    %v342 = vadd.f32 %v336, %v340
    %v343 = vpack.c.bf16 %v303, %v302
    %v345 = vsel %vm186, %v343, 0
    %347 = vmatprep.subr.bf16.mxu0 %v59
    %348 = vmatpush1.bf16.msra.mxu0 %v58
    %349 = vmatprep.subr.bf16.mxu0 %v63
    %350 = vmatpush1.bf16.msra.mxu0 %v62
    %351 = vmatprep.subr.bf16.mxu0 0
    %352 = vmatpush1.bf16.msra.mxu0 0
    %353 = vmatprep.subr.bf16.mxu0 0
    %354 = vmatpush1.bf16.msra.mxu0 0
    %355 = vmatprep.subr.bf16.mxu0 0
    %356 = vmatpush1.bf16.msra.mxu0 0
    %357 = vmatprep.subr.bf16.mxu0 0
    %358 = vmatpush1.bf16.msra.mxu0 0
    %359 = vmatprep.subr.bf16.mxu0 0
    %360 = vmatpush1.bf16.msra.mxu0 0
    %361 = vmatprep.subr.bf16.mxu0 0
    %362 = vmatpush1.bf16.msra.mxu0 0
    %363 = vmatprep.subr.bf16.mxu0 0
    %364 = vmatpush1.bf16.msra.mxu0 0
    %365 = vmatprep.subr.bf16.mxu0 0
    %366 = vmatpush1.bf16.msra.mxu0 0
    %367 = vmatprep.subr.bf16.mxu0 0
    %368 = vmatpush1.bf16.msra.mxu0 0
    %369 = vmatprep.subr.bf16.mxu0 0
    %370 = vmatpush1.bf16.msra.mxu0 0
    %371 = vmatprep.subr.bf16.mxu0 0
    %372 = vmatpush1.bf16.msra.mxu0 0
    %373 = vmatprep.subr.bf16.mxu0 0
    %374 = vmatpush1.bf16.msra.mxu0 0
    %375 = vmatprep.subr.bf16.mxu0 0
    %376 = vmatpush1.bf16.msra.mxu0 0
    %377 = vmatprep.subr.bf16.mxu0 0
    %378 = vmatpush1.bf16.msra.mxu0 0
    %379 = vmatprep.mubr.bf16.mxu0 0
    %380 = vmatmul.mubr.bf16.gmra.mrb[0].mxu0 %v345
    %v381 = vpop.f32.mrb[0].mxu0
    %v382 = vadd.f32 0.0, %v381
    %v383 = vpop.f32.mrb[0].mxu0
    %v384 = vadd.f32 0.0, %v383
    %v385 = vpop.f32.mrb[0].mxu0
    %v386 = vadd.f32 0.0, %v385
    %v387 = vpop.f32.mrb[0].mxu0
    %v388 = vadd.f32 0.0, %v387
    %389 = vdwg.mxu0
    %v390 = vxor.u32 %v382, 2147483648
    %v391 = vxor.u32 %v386, 2147483648
    %v392 = vmul.f32 %v390, 1.442695
    %v393 = vpow.pop %v392
    %v394 = vmul.f32 %v391, 1.442695
    %v395 = vpow.pop %v394
    %v396 = vadd.f32 %v393, 1.0
    %v397 = vadd.f32 %v395, 1.0
    %v398 = vrcp.pop %v396
    %v399 = vmul.f32 1.0, %v398
    %v400 = vrcp.pop %v397
    %v401 = vmul.f32 1.0, %v400
    %v402 = vmul.f32 %v399, %v384
    %v403 = vmul.f32 %v401, %v388
    %v404 = vadd.f32 %v341, %v402
    %v405 = vadd.f32 %v342, %v403
    %v406 = vadd.f32 %v404, %v179
    %v407 = vadd.f32 %v405, %v182
    %v408 = vpack.c.bf16 %v407, %v406
    %v409 = vlaneseq
    %v410 = vshrl.u32 %v409, 7
    %v411 = vsub.s32 3, %v410
    %v412 = vrot.slane %v69, %v411
    %v414 = vsel %vm186, %v408, 0
    %416 = vmatprep.subr.bf16.mxu0 0
    %417 = vmatpush1.bf16.msra.mxu0 %v61
    %418 = vmatprep.subr.bf16.mxu0 0
    %419 = vmatpush1.bf16.msra.mxu0 %v65
    %420 = vmatprep.subr.bf16.mxu0 0
    %421 = vmatpush1.bf16.msra.mxu0 0
    %422 = vmatprep.subr.bf16.mxu0 0
    %423 = vmatpush1.bf16.msra.mxu0 0
    %424 = vmatprep.subr.bf16.mxu0 0
    %425 = vmatpush1.bf16.msra.mxu0 0
    %426 = vmatprep.subr.bf16.mxu0 0
    %427 = vmatpush1.bf16.msra.mxu0 0
    %428 = vmatprep.subr.bf16.mxu0 0
    %429 = vmatpush1.bf16.msra.mxu0 0
    %430 = vmatprep.subr.bf16.mxu0 0
    %431 = vmatpush1.bf16.msra.mxu0 0
    %432 = vmatprep.subr.bf16.mxu0 0
    %433 = vmatpush1.bf16.msra.mxu0 0
    %434 = vmatprep.subr.bf16.mxu0 0
    %435 = vmatpush1.bf16.msra.mxu0 0
    %436 = vmatprep.subr.bf16.mxu0 0
    %437 = vmatpush1.bf16.msra.mxu0 0
    %438 = vmatprep.subr.bf16.mxu0 0
    %439 = vmatpush1.bf16.msra.mxu0 0
    %440 = vmatprep.subr.bf16.mxu0 0
    %441 = vmatpush1.bf16.msra.mxu0 0
    %442 = vmatprep.subr.bf16.mxu0 0
    %443 = vmatpush1.bf16.msra.mxu0 0
    %444 = vmatprep.subr.bf16.mxu0 0
    %445 = vmatpush1.bf16.msra.mxu0 0
    %446 = vmatprep.subr.bf16.mxu0 0
    %447 = vmatpush1.bf16.msra.mxu0 0
    %448 = vmatprep.mubr.bf16.mxu0 0
    %449 = vmatmul.mubr.bf16.gmra.mrb[0].mxu0 %v414
    %v450 = vpop.f32.mrb[0].mxu0
    %v451 = vadd.f32 %v412, %v450
    %v452 = vpop.f32.mrb[0].mxu0
    %v453 = vpop.f32.mrb[0].mxu0
    %v454 = vadd.f32 %v412, %v453
    %v455 = vpop.f32.mrb[0].mxu0
    %456 = vdwg.mxu0
    %v457 = vsub.f32 %v451, %v128
    %v458 = vsub.f32 %v454, %v132
    %459 = vset.pattern.permute.xlu0 2
    %460 = vperm.xlu0 %459, %v70
    %v461 = vpop.permute.xlu0 %460
    %463 = vset.pattern.permute.xlu0 2
    %464 = vperm.xlu0 %463, %v71
    %v465 = vpop.permute.xlu0 %464
    %v467 = vmul.f32 %v457, %v461
    %v468 = vmul.f32 %v458, %v465
    %v469 = vmul.f32 %v467, %v104
    %v470 = vmul.f32 %v468, %v111
    %v471 = vadd.f32 %v469, %v80
    %v472 = vadd.f32 %v470, %v81
    %vm473 = vcmask 64512
    %474 = vst.msk [vmem:[%s2] sm:$0xff] %vm473, %v471
    %475 = vst.msk [vmem:[%s2 + $0x8] sm:$0xff] %vm473, %v472
    // Predicated region
    $region18: #{forward.1} parent=1 // pred_check
      _
    $region19: #{forward.1} parent=1 // pred_check_branch
      %477 = sbr.rel (0) target = $region21
    $region20: #{forward.1} parent=1 // pred_region
      _
    $region21: #{forward.1} parent=1 // pred_fallthru
      _
    // Predicated region
    $region22: #{forward.1} parent=1 // pred_check
      _
    $region23: #{forward.1} parent=1 // pred_check_branch
      %479 = sbr.rel (0) target = $region25
    $region24: #{forward.1} parent=1 // pred_region
      _
    $region25: #{forward.1} parent=1 // pred_fallthru
      _
    %480 = vsyncpa [#allocation3], 1
    %481 = vsyncpa [#allocation5], 1

</llo_original>
